<compile_context>
chip_gen: v5e
topology: v5e:2x2
jax: 0.10.0
libtpu: 0.0.40
codegen_flags: <defaults>
</compile_context>

<pallas_src>
import jax
import jax.numpy as jnp
from jax.experimental import pallas as pl
from jax.experimental.pallas import tpu as pltpu


def _round_up(x, mult):
    return ((x + mult - 1) // mult) * mult


def _stem_matmul_kernel(lhs_ref, w_ref, shift_ref, o_ref):
    """One tile of fused conv(3x3)+BN(eval)+ReLU as a single MXU dot.

    lhs_ref:   (tile_m, 9*Cin)   im2col rows (output pixels) for this tile.
    w_ref:     (9*Cin, Cout_p)   conv taps with BN scale folded in (Cout padded).
    shift_ref: (1, Cout_p)       BN shift (beta - mean*scale), f32.
    o_ref:     (tile_m, Cout_p)  output tile.
    """
    y = jnp.dot(lhs_ref[...], w_ref[...], preferred_element_type=jnp.float32)
    y = y + shift_ref[...]
    o_ref[...] = jnp.maximum(y, 0.0).astype(o_ref.dtype)


def resnet_bottom_forward(x_nchw, conv_w, bn_gamma, bn_beta, bn_mean, bn_var,
                          eps=1e-5, matmul_dtype=None, out_dtype=None,
                          lane_pad_cout=True, target_tile_m=512):
    """x_nchw: (N, Cin, H, W). conv_w: (Cout, Cin, 3, 3). Returns NCHW."""
    n, cin, h, w = x_nchw.shape
    cout = conv_w.shape[0]
    k9 = 9 * cin
    out_dtype = x_nchw.dtype if out_dtype is None else out_dtype

    # ---- wrapper glue (layout only; XLA fuses pad+slice+concat into one pass) ----
    # NCHW -> NHWC (channels on lanes) + 1-pixel zero halo.
    x_nhwc = jnp.transpose(x_nchw, (0, 2, 3, 1))
    xp = jnp.pad(x_nhwc, ((0, 0), (1, 1), (1, 1), (0, 0)))        # (N,H+2,W+2,Cin)
    # Small im2col: pack the 9 taps into the contraction dim (order dy, dx, ci).
    patches = jnp.concatenate(
        [xp[:, dy:dy + h, dx:dx + w, :] for dy in range(3) for dx in range(3)],
        axis=-1)                                                  # (N,H,W,9*Cin)
    m = h * w
    lhs = patches.reshape(n, m, k9)

    # Fold BatchNorm (eval) into the conv: scale -> weights, keep only shift.
    scale = bn_gamma / jnp.sqrt(bn_var + eps)                     # (Cout,)
    shift = bn_beta - bn_mean * scale                             # (Cout,)
    w_taps = jnp.transpose(conv_w, (2, 3, 1, 0)) * scale          # (3,3,Cin,Cout)
    w_k = w_taps.reshape(k9, cout)                                # matches patch order

    # Lane-dense output channels (unmasked full-lane stores).
    cout_p = _round_up(cout, 128) if lane_pad_cout else cout
    if cout_p != cout:
        w_k = jnp.pad(w_k, ((0, 0), (0, cout_p - cout)))
    shift_p = jnp.pad(shift, (0, cout_p - cout)).reshape(1, cout_p).astype(jnp.float32)

    if matmul_dtype is not None:       # bf16 inputs help on v5e/v6e/v7x alike
        lhs = lhs.astype(matmul_dtype)
        w_k = w_k.astype(matmul_dtype)

    # Row tiling: ~target_tile_m output pixels per grid step (mult of 8).
    tile_m = min(target_tile_m, _round_up(m, 8))
    m_pad = _round_up(m, tile_m)
    if m_pad != m:
        lhs = jnp.pad(lhs, ((0, 0), (0, m_pad - m), (0, 0)))

    # Explicit scoped-VMEM budget from the double-buffered tile working set.
    in_isz = jnp.dtype(matmul_dtype or lhs.dtype).itemsize
    out_isz = jnp.dtype(out_dtype).itemsize
    lhs_tile_b = tile_m * _round_up(k9, 128) * in_isz
    out_tile_b = tile_m * cout_p * out_isz
    w_b = _round_up(k9, 8) * cout_p * in_isz
    vmem_limit = max(2 * (lhs_tile_b + out_tile_b) + 2 * w_b + (2 << 20),
                     16 * 1024 * 1024)

    out_flat = pl.pallas_call(
        _stem_matmul_kernel,
        out_shape=jax.ShapeDtypeStruct((n, m_pad, cout_p), out_dtype),
        grid_spec=pltpu.PrefetchScalarGridSpec(
            num_scalar_prefetch=0,
            grid=(n, m_pad // tile_m),
            in_specs=[
                pl.BlockSpec((None, tile_m, k9), lambda b, mi: (b, mi, 0)),
                pl.BlockSpec((k9, cout_p), lambda b, mi: (0, 0)),
                pl.BlockSpec((1, cout_p), lambda b, mi: (0, 0)),
            ],
            out_specs=pl.BlockSpec((None, tile_m, cout_p),
                                   lambda b, mi: (b, mi, 0)),
        ),
        compiler_params=pltpu.CompilerParams(
            dimension_semantics=("parallel", "parallel"),
            vmem_limit_bytes=int(vmem_limit)),
    )(lhs, w_k, shift_p)

    # Drop row/channel padding; back to NCHW to match the PyTorch interface.
    # (Consumers that accept NHWC can skip this transpose.)
    out_nhwc = out_flat[:, :m, :cout].reshape(n, h, w, cout)
    return jnp.transpose(out_nhwc, (0, 3, 1, 2))


def _reference(x_nchw, conv_w, bn_gamma, bn_beta, bn_mean, bn_var, eps=1e-5):
    """Pure-JAX reference for the same module_list (conv -> BN(eval) -> ReLU)."""
    y = jax.lax.conv_general_dilated(
        x_nchw, conv_w, window_strides=(1, 1), padding=((1, 1), (1, 1)),
        dimension_numbers=("NCHW", "OIHW", "NCHW"))
    scale = (bn_gamma / jnp.sqrt(bn_var + eps)).reshape(1, -1, 1, 1)
    shift = (bn_beta - bn_mean * bn_gamma / jnp.sqrt(bn_var + eps)).reshape(1, -1, 1, 1)
    return jnp.maximum(y * scale + shift, 0.0)


if __name__ == "__main__":
    key = jax.random.PRNGKey(0)
    kx, kw, kg, kb, km, kv = jax.random.split(key, 6)

    N, Cin, H, W = 2, 4, 16, 16
    Cout = 32

    x = jax.random.normal(kx, (N, Cin, H, W), dtype=jnp.float32)
    conv_w = 0.1 * jax.random.normal(kw, (Cout, Cin, 3, 3), dtype=jnp.float32)
    bn_gamma = 1.0 + 0.1 * jax.random.normal(kg, (Cout,), dtype=jnp.float32)
    bn_beta = 0.1 * jax.random.normal(kb, (Cout,), dtype=jnp.float32)
    bn_mean = 0.1 * jax.random.normal(km, (Cout,), dtype=jnp.float32)
    bn_var = jnp.abs(jax.random.normal(kv, (Cout,), dtype=jnp.float32)) + 0.5

    ref = _reference(x, conv_w, bn_gamma, bn_beta, bn_mean, bn_var)

    # f32 path (exact vs reference).
    out = resnet_bottom_forward(x, conv_w, bn_gamma, bn_beta, bn_mean, bn_var)
    out = jax.block_until_ready(out)
    assert out.shape == (N, Cout, H, W), out.shape
    assert jnp.allclose(out, ref, atol=1e-4, rtol=1e-4), \
        float(jnp.max(jnp.abs(out - ref)))

    # bf16 matmul-input path (halves input HBM bytes on all gens), f32 accumulate.
    out_bf16 = resnet_bottom_forward(x, conv_w, bn_gamma, bn_beta, bn_mean,
                                     bn_var, matmul_dtype=jnp.bfloat16)
    out_bf16 = jax.block_until_ready(out_bf16)
    assert jnp.allclose(out_bf16, ref, atol=5e-2, rtol=5e-2), \
        float(jnp.max(jnp.abs(out_bf16 - ref)))

    print("KERNEL_OK")
</pallas_src>

<mosaic_0001>
module attributes {stable_mosaic.version = 11 : i64} {
  func.func @_stem_matmul_kernel(%arg0: i32, %arg1: i32, %arg2: memref<1x256x36xf32, #tpu.memory_space<vmem>>, %arg3: memref<36x128xf32, #tpu.memory_space<vmem>>, %arg4: memref<1x128xf32, #tpu.memory_space<vmem>>, %arg5: memref<1x256x128xf32, #tpu.memory_space<vmem>>) attributes {dimension_semantics = [#tpu.dimension_semantics<parallel>, #tpu.dimension_semantics<parallel>], iteration_bounds = array<i64: 2, 1>, scalar_prefetch = 0 : i64, scratch_operands = 0 : i64, tpu.core_type = #tpu.core_type<tc>, window_params = [{transform_indices = @transform_0, window_bounds = array<i64: 1, 256, 36>}, {pipeline_mode = #tpu.pipeline_mode<synchronous>, transform_indices = @transform_1, window_bounds = array<i64: 36, 128>}, {pipeline_mode = #tpu.pipeline_mode<synchronous>, transform_indices = @transform_2, window_bounds = array<i64: 1, 128>}, {transform_indices = @transform_3, window_bounds = array<i64: 1, 256, 128>}]} {
    %c0 = arith.constant 0 : index
    %c0_0 = arith.constant 0 : index
    %c0_1 = arith.constant 0 : index
    %0 = vector.load %arg2[%c0, %c0_0, %c0_1] : memref<1x256x36xf32, #tpu.memory_space<vmem>>, vector<1x256x36xf32>
    %1 = vector.shape_cast %0 : vector<1x256x36xf32> to vector<256x36xf32>
    %c0_2 = arith.constant 0 : index
    %c0_3 = arith.constant 0 : index
    %2 = vector.load %arg3[%c0_2, %c0_3] : memref<36x128xf32, #tpu.memory_space<vmem>>, vector<36x128xf32>
    %cst = arith.constant dense<0.000000e+00> : vector<256x128xf32>
    %3 = tpu.matmul %1, %2, %cst {dimension_numbers = #tpu.dot_dimension_numbers<[1], [0], [0], [1], [0, 0, 1, 1], [], []>} : vector<256x36xf32>, vector<36x128xf32>, vector<256x128xf32> -> vector<256x128xf32>
    %c0_4 = arith.constant 0 : index
    %c0_5 = arith.constant 0 : index
    %4 = vector.load %arg4[%c0_4, %c0_5] : memref<1x128xf32, #tpu.memory_space<vmem>>, vector<1x128xf32>
    %5 = vector.broadcast %4 : vector<1x128xf32> to vector<256x128xf32>
    %6 = arith.addf %3, %5 : vector<256x128xf32>
    %cst_6 = arith.constant 0.000000e+00 : f32
    %7 = vector.broadcast %cst_6 : f32 to vector<256x128xf32>
    %8 = arith.maximumf %6, %7 : vector<256x128xf32>
    %c0_7 = arith.constant 0 : index
    %c0_8 = arith.constant 0 : index
    %c0_9 = arith.constant 0 : index
    %9 = vector.load %arg5[%c0_7, %c0_8, %c0_9] : memref<1x256x128xf32, #tpu.memory_space<vmem>>, vector<1x256x128xf32>
    %10 = vector.shape_cast %9 : vector<1x256x128xf32> to vector<256x128xf32>
    %11 = vector.shape_cast %8 : vector<256x128xf32> to vector<1x256x128xf32>
    tpu.vector_store %arg5[%c0_7, %c0_8, %c0_9], %11 {strides = array<i32>} : memref<1x256x128xf32, #tpu.memory_space<vmem>>, vector<1x256x128xf32>,
    return
  }
  func.func @transform_0(%arg0: i32, %arg1: i32) -> (i32, i32, i32) {
    %c0_i32 = arith.constant 0 : i32
    %c0_i32_0 = arith.constant 0 : i32
    return %arg0, %arg1, %c0_i32 : i32, i32, i32
  }
  func.func @transform_1(%arg0: i32, %arg1: i32) -> (i32, i32) {
    %c0_i32 = arith.constant 0 : i32
    %c0_i32_0 = arith.constant 0 : i32
    %c0_i32_1 = arith.constant 0 : i32
    return %c0_i32, %c0_i32_0 : i32, i32
  }
  func.func @transform_2(%arg0: i32, %arg1: i32) -> (i32, i32) {
    %c0_i32 = arith.constant 0 : i32
    %c0_i32_0 = arith.constant 0 : i32
    %c0_i32_1 = arith.constant 0 : i32
    return %c0_i32, %c0_i32_0 : i32, i32
  }
  func.func @transform_3(%arg0: i32, %arg1: i32) -> (i32, i32, i32) {
    %c0_i32 = arith.constant 0 : i32
    %c0_i32_0 = arith.constant 0 : i32
    return %arg0, %arg1, %c0_i32 : i32, i32, i32
  }
}

</mosaic_0001>

<llo_original>
// kernel: tpu_custom_call.1
$region0: #{tpu_custom_call.1}
  #allocation0 [shape = 'u32[]', space=smem, size = 0x4, offset = 0x4, fixed_abs, tag = 'smem constant byte address 0x4 - core index']
  #allocation1 [shape = 'u32[72,128]{1,0:T(1,128)}', space=vmem, size = 0x9000, scoped, tag = 'internal scratch']
  %s0 = inlined_call_operand.vmem [shape: f32[2,256,36], index: 0, kind: input, shape index: {}]
  %s1 = inlined_call_operand.vmem [shape: f32[36,128], index: 1, kind: input, shape index: {}]
  %s2 = inlined_call_operand.vmem [shape: f32[1,128], index: 2, kind: input, shape index: {}]
  %s3 = inlined_call_operand.hbm [shape: f32[2,256,128], index: 3, kind: output, shape index: {}]
  %s4 = sld [smem:[#allocation0]]
  $region45: #{tpu_custom_call.1} parent=0
    _
  %s6 = ssub.s32 1, %s4
  %s7 = scalar_select 0, %s6, %s4
  $region1: #{tpu_custom_call.1} parent=0
    #allocation2 [shape = 'u8[262144]{0}', space=vmem, size = 0x40000, scoped, tag = 'output window, operand 0']
    #allocation3 [shape = 's32[2]{0}', space=sflag, size = 0x8, scoped, tag = 'scoped memory for tpu_custom_call.1']
    %8 = vsyncpa [#allocation3], 0
    %s9 = scalar_lea.sflag [#allocation3], 1
    %10 = vsyncpa %s9, 0
    loop: start=0, step=1, limit=4
    $region2: #{tpu_custom_call.1} parent=1 // loop_pre_header
      _
    $region3: #{tpu_custom_call.1} parent=1 // loop_header
      %s12 = sphi 0, %s16
      %p13 = scmp.ge.s32.totalorder %s12, 4
      %s19 = sphi 0, %s31
      %s20 = sphi 0, %s27
      %s21 = sphi 0, %s19
      %s22 = sphi 0, %s20
      %s23 = sphi 0, %s21
      %s24 = sphi 0, %s22
      %s36 = sphi 0, %s38
      %s39 = sphi 0, %s36
      %s40 = sphi 0, %s39
      %s56 = sphi 0, %s40
      %s60 = sphi 0, %s60
      %s62 = sphi 0, %s60
      %s63 = sphi 0, %s62
      %s77 = sphi 0, %s63
      %s81 = sphi 0, %s81
      %s83 = sphi 0, %s81
      %s84 = sphi 0, %s83
      %s98 = sphi 0, %s84
      %s106 = sphi 0, %s108
      %s109 = sphi 0, %s106
      %s110 = sphi 0, %s109
      %s126 = sphi 0, %s110
    $region4: #{tpu_custom_call.1} parent=1 // loop_header_branch
      %15 = sbr.rel (%p13) target = $region8
    $region5: #{tpu_custom_call.1} parent=1 // loop_body
      %s17 = ssub.s32 %s12, 1
      %s18 = ssub.s32 %s12, 2
      %s25 = sadd.s32 1, %s20
      %p26 = scmp.ge.s32.totalorder %s25, 1
      %s27 = scalar_select %p26, 0, %s25
      %s28 = sadd.s32 1, %s19
      %s29 = scalar_select %p26, %s28, %s19
      %p30 = scmp.ge.s32.totalorder %s29, 2
      %s31 = scalar_select %p30, 0, %s29
      %s32 = ssub.s32 %s19, %s31
      %s33 = ssub.s32 %s20, %s27
      %s34 = sor.u32 %s32, %s33
      %p35 = scmp.eq.s32.totalorder %s34, 0
      %s37 = sadd.s32 %s36, 1
      %s38 = scalar_select %p35, %s36, %s37
      %p41 = pneg %p35
      %p42 = scmp.eq.s32.totalorder %s12, 1
      %p43 = por %p41, %p42
      %p44 = scmp.ne.s32.totalorder %s36, %s39
      %p45 = scmp.eq.s32.totalorder %s12, 0
      %p46 = por %p44, %p45
      %p47 = scmp.ne.s32.totalorder %s36, %s39
      %p48 = scmp.eq.s32.totalorder %s17, 1
      %p49 = por %p47, %p48
      %p50 = scmp.ne.s32.totalorder %s39, %s40
      %p51 = scmp.eq.s32.totalorder %s17, 0
      %p52 = por %p50, %p51
      %p53 = scmp.ne.s32.totalorder %s39, %s40
      %p54 = scmp.eq.s32.totalorder %s18, 1
      %p55 = por %p53, %p54
      %p57 = scmp.ne.s32.totalorder %s40, %s56
      %p58 = scmp.eq.s32.totalorder %s18, 0
      %p59 = por %p57, %p58
      %s61 = sadd.s32 %s60, 1
      %p64 = scmp.eq.s32.totalorder %s12, 1
      %p65 = scmp.ne.s32.totalorder %s60, %s62
      %p66 = scmp.eq.s32.totalorder %s12, 0
      %p67 = por %p65, %p66
      %p68 = scmp.ne.s32.totalorder %s60, %s62
      %p69 = scmp.eq.s32.totalorder %s17, 1
      %p70 = por %p68, %p69
      %p71 = scmp.ne.s32.totalorder %s62, %s63
      %p72 = scmp.eq.s32.totalorder %s17, 0
      %p73 = por %p71, %p72
      %p74 = scmp.ne.s32.totalorder %s62, %s63
      %p75 = scmp.eq.s32.totalorder %s18, 1
      %p76 = por %p74, %p75
      %p78 = scmp.ne.s32.totalorder %s63, %s77
      %p79 = scmp.eq.s32.totalorder %s18, 0
      %p80 = por %p78, %p79
      %s82 = sadd.s32 %s81, 1
      %p85 = scmp.eq.s32.totalorder %s12, 1
      %p86 = scmp.ne.s32.totalorder %s81, %s83
      %p87 = scmp.eq.s32.totalorder %s12, 0
      %p88 = por %p86, %p87
      %p89 = scmp.ne.s32.totalorder %s81, %s83
      %p90 = scmp.eq.s32.totalorder %s17, 1
      %p91 = por %p89, %p90
      %p92 = scmp.ne.s32.totalorder %s83, %s84
      %p93 = scmp.eq.s32.totalorder %s17, 0
      %p94 = por %p92, %p93
      %p95 = scmp.ne.s32.totalorder %s83, %s84
      %p96 = scmp.eq.s32.totalorder %s18, 1
      %p97 = por %p95, %p96
      %p99 = scmp.ne.s32.totalorder %s84, %s98
      %p100 = scmp.eq.s32.totalorder %s18, 0
      %p101 = por %p99, %p100
      %s102 = ssub.s32 %s19, %s31
      %s103 = ssub.s32 %s20, %s27
      %s104 = sor.u32 %s102, %s103
      %p105 = scmp.eq.s32.totalorder %s104, 0
      %s107 = sadd.s32 %s106, 1
      %s108 = scalar_select %p105, %s106, %s107
      %p111 = pneg %p105
      %p112 = scmp.eq.s32.totalorder %s12, 1
      %p113 = por %p111, %p112
      %p114 = scmp.ne.s32.totalorder %s106, %s109
      %p115 = scmp.eq.s32.totalorder %s12, 0
      %p116 = por %p114, %p115
      %p117 = scmp.ne.s32.totalorder %s106, %s109
      %p118 = scmp.eq.s32.totalorder %s17, 1
      %p119 = por %p117, %p118
      %p120 = scmp.ne.s32.totalorder %s109, %s110
      %p121 = scmp.eq.s32.totalorder %s17, 0
      %p122 = por %p120, %p121
      %p123 = scmp.ne.s32.totalorder %s109, %s110
      %p124 = scmp.eq.s32.totalorder %s18, 1
      %p125 = por %p123, %p124
      %p127 = scmp.ne.s32.totalorder %s110, %s126
      %p128 = scmp.eq.s32.totalorder %s18, 0
      %p129 = por %p127, %p128
      %p130 = scmp.le.s32.totalorder 1, %s12
      %p131 = scmp.lt.s32.totalorder %s12, 3
      %p132 = pnand %p130, %p131
      %p133 = pneg %p132
      // Predicated region
      $region9: #{tpu_custom_call.1} parent=5 // pred_check
        _
      $region10: #{tpu_custom_call.1} parent=5 // pred_check_branch
        %135 = sbr.rel (%p132) target = $region12
      $region11: #{tpu_custom_call.1} parent=5 // pred_region
        %s136 = ssub.s32 %s12, 1
        // Predicated region
        $region13: #{tpu_custom_call.1} parent=11 // pred_check
          %p137 = pneg %p73
        $region14: #{tpu_custom_call.1} parent=11 // pred_check_branch
          %139 = sbr.rel (%p137) target = $region16
        $region15: #{tpu_custom_call.1} parent=11 // pred_region
          _
        $region16: #{tpu_custom_call.1} parent=11 // pred_fallthru
          _
        // Predicated region
        $region17: #{tpu_custom_call.1} parent=11 // pred_check
          %p140 = pneg %p94
        $region18: #{tpu_custom_call.1} parent=11 // pred_check_branch
          %142 = sbr.rel (%p140) target = $region20
        $region19: #{tpu_custom_call.1} parent=11 // pred_region
          _
        $region20: #{tpu_custom_call.1} parent=11 // pred_fallthru
          _
      $region12: #{tpu_custom_call.1} parent=5 // pred_fallthru
        _
      %p143 = scmp.lt.s32.totalorder %s12, 2
      // Predicated region
      $region21: #{tpu_custom_call.1} parent=5 // pred_check
        %p144 = pneg %p143
      $region22: #{tpu_custom_call.1} parent=5 // pred_check_branch
        %146 = sbr.rel (%p144) target = $region24
      $region23: #{tpu_custom_call.1} parent=5 // pred_region
        // Predicated region
        $region25: #{tpu_custom_call.1} parent=23 // pred_check
          %p147 = pneg %p46
        $region26: #{tpu_custom_call.1} parent=23 // pred_check_branch
          %149 = sbr.rel (%p147) target = $region28
        $region27: #{tpu_custom_call.1} parent=23 // pred_region
          %s150 = smul.u32 32, %s20
          %p151 = scmp.lt.s32.totalorder %s19, 1
          %s152 = scalar_select %p151, %s19, 1
          %p153 = scmp.lt.s32.totalorder %s150, 31
          %s154 = scalar_select %p153, %s150, 31
          %s155 = smul.addr %s152, 32
          %s156 = sadd.s32 %s154, %s155
          %s157 = smul.addr %s156, 8
          %s158 = scalar_lea.vmem %s0, %s157
          %s159 = smul.u32 32, %s20
        $region28: #{tpu_custom_call.1} parent=23 // pred_fallthru
          _
      $region24: #{tpu_custom_call.1} parent=5 // pred_fallthru
        _
      %p160 = scmp.le.s32.totalorder 1, %s12
      %p161 = scmp.lt.s32.totalorder %s12, 3
      %p162 = pnand %p160, %p161
      %p163 = pneg %p162
      // Predicated region
      $region29: #{tpu_custom_call.1} parent=5 // pred_check
        _
      $region30: #{tpu_custom_call.1} parent=5 // pred_check_branch
        %165 = sbr.rel (%p162) target = $region32
      $region31: #{tpu_custom_call.1} parent=5 // pred_region
        %s166 = ssub.s32 %s12, 1
        %s167 = smul.u32 32, %s22
        %p168 = scmp.lt.s32.totalorder %s21, 1
        %s169 = scalar_select %p168, %s21, 1
        %p170 = scmp.lt.s32.totalorder %s167, 31
        %s171 = scalar_select %p170, %s167, 31
        %s172 = smul.addr %s169, 32
        %s173 = sadd.s32 %s171, %s172
        %s174 = smul.addr %s173, 8
        %s175 = scalar_lea.vmem %s0, %s174
        %p176 = pneg %p52
        %p177 = pneg %p49
        %p178 = pneg %p73
        %p179 = pneg %p70
        %p180 = pneg %p94
        %p181 = pneg %p91
        %p182 = pneg %p122
        %p183 = pneg %p119
        %s184 = sand.u32 %s109, 1
        %s185 = scalar_lea.sflag [#allocation3], %s184
        %s186 = sand.u32 %s109, 1
        %s187 = smul.addr %s186, 256
        %s188 = scalar_lea.vmem [#allocation2], %s187
        %s189 = smul.u32 32, %s22
        %p190 = scmp.lt.s32.totalorder %s21, 1
        %s191 = scalar_select %p190, %s21, 1
        %p192 = scmp.lt.s32.totalorder %s189, 31
        %s193 = scalar_select %p192, %s189, 31
        %s194 = smul.addr %s191, 32
        %s195 = sadd.s32 %s193, %s194
        %s196 = smul.addr %s195, 8
        %s197 = scalar_lea.vmem %s0, %s196
        %s198 = smul.u32 32, %s22
        %s199 = smul.u32 32, %s22
        %v200 = vld [vmem:[%s197] sm:$0xff]
        %v201 = vld [vmem:[%s197 + $0x8] sm:$0xff]
        %v202 = vld [vmem:[%s197 + $0x10] sm:$0xff]
        %v203 = vld [vmem:[%s197 + $0x18] sm:$0xff]
        %v204 = vld [vmem:[%s197 + $0x20] sm:$0xff]
        %v205 = vld [vmem:[%s197 + $0x28] sm:$0xff]
        %v206 = vld [vmem:[%s197 + $0x30] sm:$0xff]
        %v207 = vld [vmem:[%s197 + $0x38] sm:$0xff]
        %v208 = vld [vmem:[%s197 + $0x40] sm:$0xff]
        %v209 = vld [vmem:[%s197 + $0x48] sm:$0xff]
        %v210 = vld [vmem:[%s197 + $0x50] sm:$0xff]
        %v211 = vld [vmem:[%s197 + $0x58] sm:$0xff]
        %v212 = vld [vmem:[%s197 + $0x60] sm:$0xff]
        %v213 = vld [vmem:[%s197 + $0x68] sm:$0xff]
        %v214 = vld [vmem:[%s197 + $0x70] sm:$0xff]
        %v215 = vld [vmem:[%s197 + $0x78] sm:$0xff]
        %v216 = vld [vmem:[%s197 + $0x80] sm:$0xff]
        %v217 = vld [vmem:[%s197 + $0x88] sm:$0xff]
        %v218 = vld [vmem:[%s197 + $0x90] sm:$0xff]
        %v219 = vld [vmem:[%s197 + $0x98] sm:$0xff]
        %v220 = vld [vmem:[%s197 + $0xa0] sm:$0xff]
        %v221 = vld [vmem:[%s197 + $0xa8] sm:$0xff]
        %v222 = vld [vmem:[%s197 + $0xb0] sm:$0xff]
        %v223 = vld [vmem:[%s197 + $0xb8] sm:$0xff]
        %v224 = vld [vmem:[%s197 + $0xc0] sm:$0xff]
        %v225 = vld [vmem:[%s197 + $0xc8] sm:$0xff]
        %v226 = vld [vmem:[%s197 + $0xd0] sm:$0xff]
        %v227 = vld [vmem:[%s197 + $0xd8] sm:$0xff]
        %v228 = vld [vmem:[%s197 + $0xe0] sm:$0xff]
        %v229 = vld [vmem:[%s197 + $0xe8] sm:$0xff]
        %v230 = vld [vmem:[%s197 + $0xf0] sm:$0xff]
        %v231 = vld [vmem:[%s197 + $0xf8] sm:$0xff]
        %v232 = vld [vmem:[%s1] sm:$0xff]
        %v233 = vld [vmem:[%s1 + $0x8] sm:$0xff]
        %v234 = vld [vmem:[%s1 + $0x10] sm:$0xff]
        %v235 = vld [vmem:[%s1 + $0x18] sm:$0xff]
        %v236 = vld [vmem:[%s1 + $0x20] sm:$0xf]
        %v237 = vld [vmem:[%s2] sm:$0x1]
        %v239 = vperm.slane %v237, 0
        %vm241 = vcmask 293888
        %v243 = vsel %vm241, %v200, 0
        %v246 = vsel %vm241, %v201, 0
        %v249 = vsel %vm241, %v202, 0
        %v252 = vsel %vm241, %v203, 0
        %v255 = vsel %vm241, %v204, 0
        %v258 = vsel %vm241, %v205, 0
        %v261 = vsel %vm241, %v206, 0
        %v264 = vsel %vm241, %v207, 0
        %v267 = vsel %vm241, %v208, 0
        %v270 = vsel %vm241, %v209, 0
        %v273 = vsel %vm241, %v210, 0
        %v276 = vsel %vm241, %v211, 0
        %v279 = vsel %vm241, %v212, 0
        %v282 = vsel %vm241, %v213, 0
        %v285 = vsel %vm241, %v214, 0
        %v288 = vsel %vm241, %v215, 0
        %v291 = vsel %vm241, %v216, 0
        %v294 = vsel %vm241, %v217, 0
        %v297 = vsel %vm241, %v218, 0
        %v300 = vsel %vm241, %v219, 0
        %v303 = vsel %vm241, %v220, 0
        %v306 = vsel %vm241, %v221, 0
        %v309 = vsel %vm241, %v222, 0
        %v312 = vsel %vm241, %v223, 0
        %v315 = vsel %vm241, %v224, 0
        %v318 = vsel %vm241, %v225, 0
        %v321 = vsel %vm241, %v226, 0
        %v324 = vsel %vm241, %v227, 0
        %v327 = vsel %vm241, %v228, 0
        %v330 = vsel %vm241, %v229, 0
        %v333 = vsel %vm241, %v230, 0
        %v336 = vsel %vm241, %v231, 0
        %vm338 = vcmask 1043456
        %v340 = vsel %vm338, %v236, 0
        %342 = vmatpush.msra.mxu0 0.0
        %343 = vmatpush.msra.mxu0 0.0
        %344 = vmatpush.msra.mxu0 0.0
        %345 = vmatpush.msra.mxu0 0.0
        %346 = vmatpush.msra.mxu0 0.0
        %347 = vmatpush.msra.mxu0 0.0
        %348 = vmatpush.msra.mxu0 0.0
        %349 = vmatpush.msra.mxu0 0.0
        %350 = vmatpush.msra.mxu0 0.0
        %351 = vmatpush.msra.mxu0 0.0
        %352 = vmatpush.msra.mxu0 0.0
        %353 = vmatpush.msra.mxu0 %v340
        %354 = vmatpush.msra.mxu0 %v235
        %355 = vmatpush.msra.mxu0 %v234
        %356 = vmatpush.msra.mxu0 %v233
        %357 = vmatpush.msra.mxu0 %v232
        %358 = vmatmul.f32.gmra.mxu0 %v243
        %v359 = vpop.f32.mrf.mxu0
        %v360 = vadd.f32 %v239, %v359
        %361 = vmatmul.f32.gmra.mxu0 %v246
        %v362 = vpop.f32.mrf.mxu0
        %v363 = vadd.f32 %v239, %v362
        %364 = vmatmul.f32.gmra.mxu0 %v249
        %v365 = vpop.f32.mrf.mxu0
        %v366 = vadd.f32 %v239, %v365
        %367 = vmatmul.f32.gmra.mxu0 %v252
        %v368 = vpop.f32.mrf.mxu0
        %v369 = vadd.f32 %v239, %v368
        %370 = vmatmul.f32.gmra.mxu0 %v255
        %v371 = vpop.f32.mrf.mxu0
        %v372 = vadd.f32 %v239, %v371
        %373 = vmatmul.f32.gmra.mxu0 %v258
        %v374 = vpop.f32.mrf.mxu0
        %v375 = vadd.f32 %v239, %v374
        %376 = vmatmul.f32.gmra.mxu0 %v261
        %v377 = vpop.f32.mrf.mxu0
        %v378 = vadd.f32 %v239, %v377
        %379 = vmatmul.f32.gmra.mxu0 %v264
        %v380 = vpop.f32.mrf.mxu0
        %v381 = vadd.f32 %v239, %v380
        %382 = vmatmul.f32.gmra.mxu0 %v267
        %v383 = vpop.f32.mrf.mxu0
        %v384 = vadd.f32 %v239, %v383
        %385 = vmatmul.f32.gmra.mxu0 %v270
        %v386 = vpop.f32.mrf.mxu0
        %v387 = vadd.f32 %v239, %v386
        %388 = vmatmul.f32.gmra.mxu0 %v273
        %v389 = vpop.f32.mrf.mxu0
        %v390 = vadd.f32 %v239, %v389
        %391 = vmatmul.f32.gmra.mxu0 %v276
        %v392 = vpop.f32.mrf.mxu0
        %v393 = vadd.f32 %v239, %v392
        %394 = vmatmul.f32.gmra.mxu0 %v279
        %v395 = vpop.f32.mrf.mxu0
        %v396 = vadd.f32 %v239, %v395
        %397 = vmatmul.f32.gmra.mxu0 %v282
        %v398 = vpop.f32.mrf.mxu0
        %v399 = vadd.f32 %v239, %v398
        %400 = vmatmul.f32.gmra.mxu0 %v285
        %v401 = vpop.f32.mrf.mxu0
        %v402 = vadd.f32 %v239, %v401
        %403 = vmatmul.f32.gmra.mxu0 %v288
        %v404 = vpop.f32.mrf.mxu0
        %v405 = vadd.f32 %v239, %v404
        %406 = vmatmul.f32.gmra.mxu0 %v291
        %v407 = vpop.f32.mrf.mxu0
        %v408 = vadd.f32 %v239, %v407
        %409 = vmatmul.f32.gmra.mxu0 %v294
        %v410 = vpop.f32.mrf.mxu0
        %v411 = vadd.f32 %v239, %v410
        %412 = vmatmul.f32.gmra.mxu0 %v297
        %v413 = vpop.f32.mrf.mxu0
        %v414 = vadd.f32 %v239, %v413
        %415 = vmatmul.f32.gmra.mxu0 %v300
        %v416 = vpop.f32.mrf.mxu0
        %v417 = vadd.f32 %v239, %v416
        %418 = vmatmul.f32.gmra.mxu0 %v303
        %v419 = vpop.f32.mrf.mxu0
        %v420 = vadd.f32 %v239, %v419
        %421 = vmatmul.f32.gmra.mxu0 %v306
        %v422 = vpop.f32.mrf.mxu0
        %v423 = vadd.f32 %v239, %v422
        %424 = vmatmul.f32.gmra.mxu0 %v309
        %v425 = vpop.f32.mrf.mxu0
        %v426 = vadd.f32 %v239, %v425
        %427 = vmatmul.f32.gmra.mxu0 %v312
        %v428 = vpop.f32.mrf.mxu0
        %v429 = vadd.f32 %v239, %v428
        %430 = vmatmul.f32.gmra.mxu0 %v315
        %v431 = vpop.f32.mrf.mxu0
        %v432 = vadd.f32 %v239, %v431
        %433 = vmatmul.f32.gmra.mxu0 %v318
        %v434 = vpop.f32.mrf.mxu0
        %v435 = vadd.f32 %v239, %v434
        %436 = vmatmul.f32.gmra.mxu0 %v321
        %v437 = vpop.f32.mrf.mxu0
        %v438 = vadd.f32 %v239, %v437
        %439 = vmatmul.f32.gmra.mxu0 %v324
        %v440 = vpop.f32.mrf.mxu0
        %v441 = vadd.f32 %v239, %v440
        %442 = vmatmul.f32.gmra.mxu0 %v327
        %v443 = vpop.f32.mrf.mxu0
        %v444 = vadd.f32 %v239, %v443
        %445 = vmatmul.f32.gmra.mxu0 %v330
        %v446 = vpop.f32.mrf.mxu0
        %v447 = vadd.f32 %v239, %v446
        %448 = vmatmul.f32.gmra.mxu0 %v333
        %v449 = vpop.f32.mrf.mxu0
        %v450 = vadd.f32 %v239, %v449
        %451 = vmatmul.f32.gmra.mxu0 %v336
        %v452 = vpop.f32.mrf.mxu0
        %v453 = vadd.f32 %v239, %v452
        %454 = vdwg.mxu0
        %v455 = vmax.f32 %v360, 0.0
        %v456 = vmax.f32 %v363, 0.0
        %v457 = vmax.f32 %v366, 0.0
        %v458 = vmax.f32 %v369, 0.0
        %v459 = vmax.f32 %v372, 0.0
        %v460 = vmax.f32 %v375, 0.0
        %v461 = vmax.f32 %v378, 0.0
        %v462 = vmax.f32 %v381, 0.0
        %v463 = vmax.f32 %v384, 0.0
        %v464 = vmax.f32 %v387, 0.0
        %v465 = vmax.f32 %v390, 0.0
        %v466 = vmax.f32 %v393, 0.0
        %v467 = vmax.f32 %v396, 0.0
        %v468 = vmax.f32 %v399, 0.0
        %v469 = vmax.f32 %v402, 0.0
        %v470 = vmax.f32 %v405, 0.0
        %v471 = vmax.f32 %v408, 0.0
        %v472 = vmax.f32 %v411, 0.0
        %v473 = vmax.f32 %v414, 0.0
        %v474 = vmax.f32 %v417, 0.0
        %v475 = vmax.f32 %v420, 0.0
        %v476 = vmax.f32 %v423, 0.0
        %v477 = vmax.f32 %v426, 0.0
        %v478 = vmax.f32 %v429, 0.0
        %v479 = vmax.f32 %v432, 0.0
        %v480 = vmax.f32 %v435, 0.0
        %v481 = vmax.f32 %v438, 0.0
        %v482 = vmax.f32 %v441, 0.0
        %v483 = vmax.f32 %v444, 0.0
        %v484 = vmax.f32 %v447, 0.0
        %v485 = vmax.f32 %v450, 0.0
        %v486 = vmax.f32 %v453, 0.0
        %487 = vst [vmem:[%s188] sm:$0xff] %v455
        %488 = vst [vmem:[%s188 + $0x8] sm:$0xff] %v456
        %489 = vst [vmem:[%s188 + $0x10] sm:$0xff] %v457
        %490 = vst [vmem:[%s188 + $0x18] sm:$0xff] %v458
        %491 = vst [vmem:[%s188 + $0x20] sm:$0xff] %v459
        %492 = vst [vmem:[%s188 + $0x28] sm:$0xff] %v460
        %493 = vst [vmem:[%s188 + $0x30] sm:$0xff] %v461
        %494 = vst [vmem:[%s188 + $0x38] sm:$0xff] %v462
        %495 = vst [vmem:[%s188 + $0x40] sm:$0xff] %v463
        %496 = vst [vmem:[%s188 + $0x48] sm:$0xff] %v464
        %497 = vst [vmem:[%s188 + $0x50] sm:$0xff] %v465
        %498 = vst [vmem:[%s188 + $0x58] sm:$0xff] %v466
        %499 = vst [vmem:[%s188 + $0x60] sm:$0xff] %v467
        %500 = vst [vmem:[%s188 + $0x68] sm:$0xff] %v468
        %501 = vst [vmem:[%s188 + $0x70] sm:$0xff] %v469
        %502 = vst [vmem:[%s188 + $0x78] sm:$0xff] %v470
        %503 = vst [vmem:[%s188 + $0x80] sm:$0xff] %v471
        %504 = vst [vmem:[%s188 + $0x88] sm:$0xff] %v472
        %505 = vst [vmem:[%s188 + $0x90] sm:$0xff] %v473
        %506 = vst [vmem:[%s188 + $0x98] sm:$0xff] %v474
        %507 = vst [vmem:[%s188 + $0xa0] sm:$0xff] %v475
        %508 = vst [vmem:[%s188 + $0xa8] sm:$0xff] %v476
        %509 = vst [vmem:[%s188 + $0xb0] sm:$0xff] %v477
        %510 = vst [vmem:[%s188 + $0xb8] sm:$0xff] %v478
        %511 = vst [vmem:[%s188 + $0xc0] sm:$0xff] %v479
        %512 = vst [vmem:[%s188 + $0xc8] sm:$0xff] %v480
        %513 = vst [vmem:[%s188 + $0xd0] sm:$0xff] %v481
        %514 = vst [vmem:[%s188 + $0xd8] sm:$0xff] %v482
        %515 = vst [vmem:[%s188 + $0xe0] sm:$0xff] %v483
        %516 = vst [vmem:[%s188 + $0xe8] sm:$0xff] %v484
        %517 = vst [vmem:[%s188 + $0xf0] sm:$0xff] %v485
        %518 = vst [vmem:[%s188 + $0xf8] sm:$0xff] %v486
        %s519 = sand.u32 %s109, 1
        %s520 = scalar_lea.sflag [#allocation3], %s519
        %s521 = sand.u32 %s109, 1
        %s522 = smul.addr %s521, 256
        %s523 = scalar_lea.vmem [#allocation2], %s522
        // Predicated region
        $region33: #{tpu_custom_call.1} parent=31 // pred_check
          %p524 = pneg %p119
        $region34: #{tpu_custom_call.1} parent=31 // pred_check_branch
          %526 = sbr.rel (%p524) target = $region36
        $region35: #{tpu_custom_call.1} parent=31 // pred_region
          %s527 = smul.u32 32, %s22
          %529 = vsyncadd %s520, 0
          %s530 = smul.addr %s21, 32
          %s531 = sadd.s32 %s527, %s530
          %s532 = smul.addr %s531, 8
          %s533 = scalar_lea.hbm %s3, %s532
          %s534 = sshll.u32 %s523, 4
          %s535 = int_to_ptr.vmem [resolvable:$true] %s534
          %s536 = sshll.u32 %s533, 4
          %s537 = int_to_ptr.hbm [resolvable:$true] %s536
          %542 = dma.vmem_to_hbm [thread:$0]  %s535, 4096, %s537, %s520, 128, 128, 8
        $region36: #{tpu_custom_call.1} parent=31 // pred_fallthru
          _
      $region32: #{tpu_custom_call.1} parent=5 // pred_fallthru
        _
      %p543 = scmp.le.s32.totalorder 2, %s12
      // Predicated region
      $region37: #{tpu_custom_call.1} parent=5 // pred_check
        %p544 = pneg %p543
      $region38: #{tpu_custom_call.1} parent=5 // pred_check_branch
        %546 = sbr.rel (%p544) target = $region40
      $region39: #{tpu_custom_call.1} parent=5 // pred_region
        %s547 = ssub.s32 %s12, 2
        // Predicated region
        $region41: #{tpu_custom_call.1} parent=39 // pred_check
          %p548 = pneg %p125
        $region42: #{tpu_custom_call.1} parent=39 // pred_check_branch
          %550 = sbr.rel (%p548) target = $region44
        $region43: #{tpu_custom_call.1} parent=39 // pred_region
          %s551 = sand.u32 %s110, 1
          %s552 = scalar_lea.sflag [#allocation3], %s551
          %s553 = sand.u32 %s110, 1
          %s554 = smul.addr %s553, 256
          %s555 = scalar_lea.vmem [#allocation2], %s554
          %557 = dma.done %s552, 4096
        $region44: #{tpu_custom_call.1} parent=39 // pred_fallthru
          _
      $region40: #{tpu_custom_call.1} parent=5 // pred_fallthru
        _
    $region6: #{tpu_custom_call.1} parent=1 // loop_footer
      %s16 = sadd.s32 1, %s12
    $region7: #{tpu_custom_call.1} parent=1 // loop_footer_branch
      %11 = sbr.rel target = $region3
    $region8: #{tpu_custom_call.1} parent=1 // loop_exit
      _
    %558 = vsyncpa [#allocation3], 1
    %s559 = scalar_lea.sflag [#allocation3], 1
    %560 = vsyncpa %s559, 1

</llo_original>
